<compile_context>
chip_gen: v5e
topology: v5e:2x2
jax: 0.10.0
libtpu: 0.0.40
codegen_flags: <defaults>
</compile_context>

<pallas_src>
import functools

import jax
import jax.numpy as jnp
from jax import lax
from jax.experimental import pallas as pl
from jax.experimental.pallas import tpu as pltpu

_LANES = 128
_SUBLANES = 8


def _triplet_loss_kernel(a_ref, p_ref, n_ref, out_ref, *, batch, tile_b):
    """One batch tile: per-row cosine losses -> one lane-dense partial sum."""
    i = pl.program_id(0)

    a = a_ref[...].astype(jnp.float32)
    p = p_ref[...].astype(jnp.float32)
    n = n_ref[...].astype(jnp.float32)

    inv_eps = jnp.float32(1e8)  # 1/eps, eps = 1e-8 (F.cosine_similarity default)

    # Per-row reductions along the embedding (lane) axis.
    aa = jnp.sum(a * a, axis=-1, keepdims=True)
    pp = jnp.sum(p * p, axis=-1, keepdims=True)
    nn_ = jnp.sum(n * n, axis=-1, keepdims=True)
    ap = jnp.sum(a * p, axis=-1, keepdims=True)
    an = jnp.sum(a * n, axis=-1, keepdims=True)

    # 1 / max(||x||, eps)  ==  min(rsqrt(sum_sq), 1/eps)  -- EUP rsqrt, no sqrt+div.
    inv_a = jnp.minimum(lax.rsqrt(aa), inv_eps)
    inv_p = jnp.minimum(lax.rsqrt(pp), inv_eps)
    inv_n = jnp.minimum(lax.rsqrt(nn_), inv_eps)

    dp = ap * (inv_a * inv_p)  # cosine_similarity(anchor, positive)
    dn = an * (inv_a * inv_n)  # cosine_similarity(anchor, negative)

    losses = (1.0 - dp) ** 2 + dn * dn  # (tile_b, 1)

    # Mask rows past the true batch (ragged last tile reads undefined data;
    # jnp.where is a select, so even NaN garbage there cannot leak through).
    row = i * tile_b + lax.broadcasted_iota(jnp.int32, (tile_b, 1), 0)
    losses = jnp.where(row < batch, losses, 0.0)

    partial = jnp.sum(losses)
    # Lane-dense, unmasked store of the per-tile partial (exactly one vreg).
    out_ref[...] = jnp.broadcast_to(partial, (1, _SUBLANES, _LANES))


def _choose_tile_b(batch, dim, itemsize):
    # Keep 3 inputs x 2 pipeline buffers under ~36 MiB: safely inside the
    # 48 MiB scoped VMEM we request, with headroom on v7x's 64 MiB physical.
    budget_bytes = 36 * 1024 * 1024
    max_rows = max(_SUBLANES, budget_bytes // (3 * 2 * dim * itemsize))
    tile = min(2048, max_rows, max(batch, _SUBLANES))
    tile = max(_SUBLANES, (tile // _SUBLANES) * _SUBLANES)
    return tile


class TripletLoss:
    """JAX/Pallas equivalent of the PyTorch TripletLoss module."""

    def __init__(self, margin):
        # NOTE: `margin` is stored but unused in the reference forward pass.
        self.margin = margin

    def __call__(self, anchor, positive, negative, size_average=True):
        assert anchor.shape == positive.shape == negative.shape
        assert anchor.ndim == 2, "expected (B, D) embeddings"
        B, D = anchor.shape
        itemsize = jnp.dtype(anchor.dtype).itemsize

        # TODO(synk): for D < 128 a batch-on-lanes layout would improve vreg /
        # XLU utilization, but transposing in the wrapper would cost more HBM
        # traffic than it saves for this memory-bound op, so keep (B, D).
        tile_b = _choose_tile_b(B, D, itemsize)
        num_tiles = pl.cdiv(B, tile_b)

        kernel = functools.partial(_triplet_loss_kernel, batch=B, tile_b=tile_b)

        in_spec = pl.BlockSpec((tile_b, D), lambda i: (i, 0))
        out_spec = pl.BlockSpec((1, _SUBLANES, _LANES), lambda i: (i, 0, 0))

        bytes_accessed = 3 * B * D * itemsize + num_tiles * _SUBLANES * _LANES * 4
        cost = pl.CostEstimate(
            flops=10 * B * D + 24 * B,
            transcendentals=3 * B,
            bytes_accessed=bytes_accessed,
        )

        partials = pl.pallas_call(
            kernel,
            out_shape=jax.ShapeDtypeStruct(
                (num_tiles, _SUBLANES, _LANES), jnp.float32
            ),
            grid=(num_tiles,),
            in_specs=[in_spec, in_spec, in_spec],
            out_specs=out_spec,
            compiler_params=pltpu.CompilerParams(
                dimension_semantics=("parallel",),
                vmem_limit_bytes=48 * 1024 * 1024,
            ),
            cost_estimate=cost,
        )(anchor, positive, negative)

        total = jnp.sum(partials[:, 0, 0])
        if size_average:
            total = total / jnp.float32(B)
        return total


def _reference(anchor, positive, negative, size_average=True):
    eps = 1e-8

    def cos(x, y):
        xn = jnp.maximum(jnp.linalg.norm(x, axis=1), eps)
        yn = jnp.maximum(jnp.linalg.norm(y, axis=1), eps)
        return jnp.sum(x * y, axis=1) / (xn * yn)

    dp = cos(anchor, positive)
    dn = cos(anchor, negative)
    losses = (1.0 - dp) ** 2 + dn ** 2
    return losses.mean() if size_average else losses.sum()


if __name__ == "__main__":
    key = jax.random.PRNGKey(0)
    loss_fn = TripletLoss(margin=1.0)

    # Case 1: small aligned batch (batch=8, hidden=32).
    k1, k2, k3 = jax.random.split(jax.random.PRNGKey(0), 3)
    B, D = 8, 32
    anchor = jax.random.normal(k1, (B, D), dtype=jnp.float32)
    positive = jax.random.normal(k2, (B, D), dtype=jnp.float32)
    negative = jax.random.normal(k3, (B, D), dtype=jnp.float32)

    out_mean = jax.block_until_ready(
        loss_fn(anchor, positive, negative, size_average=True)
    )
    ref_mean = _reference(anchor, positive, negative, size_average=True)
    assert jnp.allclose(out_mean, ref_mean, atol=1e-5, rtol=1e-5), (out_mean, ref_mean)

    out_sum = jax.block_until_ready(
        loss_fn(anchor, positive, negative, size_average=False)
    )
    ref_sum = _reference(anchor, positive, negative, size_average=False)
    assert jnp.allclose(out_sum, ref_sum, atol=1e-5, rtol=1e-5), (out_sum, ref_sum)

    # Case 2: ragged batch (batch=13 not a multiple of the tile) exercises the
    # in-kernel row masking path (no wrapper-side padding).
    k4, k5, k6 = jax.random.split(jax.random.PRNGKey(1), 3)
    B2 = 13
    a2 = jax.random.normal(k4, (B2, D), dtype=jnp.float32)
    p2 = jax.random.normal(k5, (B2, D), dtype=jnp.float32)
    n2 = jax.random.normal(k6, (B2, D), dtype=jnp.float32)

    out2 = jax.block_until_ready(loss_fn(a2, p2, n2, size_average=True))
    ref2 = _reference(a2, p2, n2, size_average=True)
    assert jnp.allclose(out2, ref2, atol=1e-5, rtol=1e-5), (out2, ref2)

    print("KERNEL_OK")
</pallas_src>

<mosaic_0001>
module attributes {stable_mosaic.version = 11 : i64} {
  func.func @_triplet_loss_kernel(%arg0: i32, %arg1: memref<8x32xf32, #tpu.memory_space<vmem>>, %arg2: memref<8x32xf32, #tpu.memory_space<vmem>>, %arg3: memref<8x32xf32, #tpu.memory_space<vmem>>, %arg4: memref<1x8x128xf32, #tpu.memory_space<vmem>>) attributes {dimension_semantics = [#tpu.dimension_semantics<parallel>], iteration_bounds = array<i64: 1>, scalar_prefetch = 0 : i64, scratch_operands = 0 : i64, tpu.core_type = #tpu.core_type<tc>, window_params = [{transform_indices = @transform_0, window_bounds = array<i64: 8, 32>}, {transform_indices = @transform_1, window_bounds = array<i64: 8, 32>}, {transform_indices = @transform_2, window_bounds = array<i64: 8, 32>}, {transform_indices = @transform_3, window_bounds = array<i64: 1, 8, 128>}]} {
    %c0 = arith.constant 0 : index
    %c0_0 = arith.constant 0 : index
    %0 = vector.load %arg1[%c0, %c0_0] : memref<8x32xf32, #tpu.memory_space<vmem>>, vector<8x32xf32>
    %c0_1 = arith.constant 0 : index
    %c0_2 = arith.constant 0 : index
    %1 = vector.load %arg2[%c0_1, %c0_2] : memref<8x32xf32, #tpu.memory_space<vmem>>, vector<8x32xf32>
    %c0_3 = arith.constant 0 : index
    %c0_4 = arith.constant 0 : index
    %2 = vector.load %arg3[%c0_3, %c0_4] : memref<8x32xf32, #tpu.memory_space<vmem>>, vector<8x32xf32>
    %3 = arith.mulf %0, %0 : vector<8x32xf32>
    %cst = arith.constant dense<0.000000e+00> : vector<8xf32>
    %4 = vector.multi_reduction <add>, %3, %cst [1] : vector<8x32xf32> to vector<8xf32>
    %5 = vector.shape_cast %4 : vector<8xf32> to vector<8x1xf32>
    %6 = arith.mulf %1, %1 : vector<8x32xf32>
    %cst_5 = arith.constant dense<0.000000e+00> : vector<8xf32>
    %7 = vector.multi_reduction <add>, %6, %cst_5 [1] : vector<8x32xf32> to vector<8xf32>
    %8 = vector.shape_cast %7 : vector<8xf32> to vector<8x1xf32>
    %9 = arith.mulf %2, %2 : vector<8x32xf32>
    %cst_6 = arith.constant dense<0.000000e+00> : vector<8xf32>
    %10 = vector.multi_reduction <add>, %9, %cst_6 [1] : vector<8x32xf32> to vector<8xf32>
    %11 = vector.shape_cast %10 : vector<8xf32> to vector<8x1xf32>
    %12 = arith.mulf %0, %1 : vector<8x32xf32>
    %cst_7 = arith.constant dense<0.000000e+00> : vector<8xf32>
    %13 = vector.multi_reduction <add>, %12, %cst_7 [1] : vector<8x32xf32> to vector<8xf32>
    %14 = vector.shape_cast %13 : vector<8xf32> to vector<8x1xf32>
    %15 = arith.mulf %0, %2 : vector<8x32xf32>
    %cst_8 = arith.constant dense<0.000000e+00> : vector<8xf32>
    %16 = vector.multi_reduction <add>, %15, %cst_8 [1] : vector<8x32xf32> to vector<8xf32>
    %17 = vector.shape_cast %16 : vector<8xf32> to vector<8x1xf32>
    %18 = math.rsqrt %5 : vector<8x1xf32>
    %cst_9 = arith.constant 1.000000e+08 : f32
    %19 = vector.broadcast %cst_9 : f32 to vector<8x1xf32>
    %20 = arith.minimumf %18, %19 : vector<8x1xf32>
    %21 = math.rsqrt %8 : vector<8x1xf32>
    %cst_10 = arith.constant 1.000000e+08 : f32
    %22 = vector.broadcast %cst_10 : f32 to vector<8x1xf32>
    %23 = arith.minimumf %21, %22 : vector<8x1xf32>
    %24 = math.rsqrt %11 : vector<8x1xf32>
    %cst_11 = arith.constant 1.000000e+08 : f32
    %25 = vector.broadcast %cst_11 : f32 to vector<8x1xf32>
    %26 = arith.minimumf %24, %25 : vector<8x1xf32>
    %27 = arith.mulf %20, %23 : vector<8x1xf32>
    %28 = arith.mulf %14, %27 : vector<8x1xf32>
    %29 = arith.mulf %20, %26 : vector<8x1xf32>
    %30 = arith.mulf %17, %29 : vector<8x1xf32>
    %cst_12 = arith.constant 1.000000e+00 : f32
    %31 = vector.broadcast %cst_12 : f32 to vector<8x1xf32>
    %32 = arith.subf %31, %28 : vector<8x1xf32>
    %33 = arith.mulf %32, %32 : vector<8x1xf32>
    %34 = arith.mulf %30, %30 : vector<8x1xf32>
    %35 = arith.addf %33, %34 : vector<8x1xf32>
    %c8_i32 = arith.constant 8 : i32
    %36 = arith.muli %arg0, %c8_i32 : i32
    %37 = tpu.iota {dimensions = array<i32: 0>} : vector<8x1xi32>
    %38 = vector.broadcast %36 : i32 to vector<8x1xi32>
    %39 = arith.addi %38, %37 : vector<8x1xi32>
    %c8_i32_13 = arith.constant 8 : i32
    %40 = vector.broadcast %c8_i32_13 : i32 to vector<8x1xi32>
    %41 = arith.cmpi slt, %39, %40 : vector<8x1xi32>
    %cst_14 = arith.constant 0.000000e+00 : f32
    %42 = vector.broadcast %cst_14 : f32 to vector<8x1xf32>
    %43 = arith.select %41, %35, %42 : vector<8x1xi1>, vector<8x1xf32>
    %44 = vector.shape_cast %43 : vector<8x1xf32> to vector<1x8x1xf32>
    %cst_15 = arith.constant dense<0.000000e+00> : vector<1xf32>
    %45 = vector.multi_reduction <add>, %44, %cst_15 [1, 2] : vector<1x8x1xf32> to vector<1xf32>
    %46 = vector.shape_cast %45 : vector<1xf32> to vector<1x1x1xf32>
    %47 = vector.extract %46[0, 0, 0] : f32 from vector<1x1x1xf32>
    %48 = vector.broadcast %47 : f32 to vector<1x8x128xf32>
    %c0_16 = arith.constant 0 : index
    %c0_17 = arith.constant 0 : index
    %c0_18 = arith.constant 0 : index
    %49 = vector.load %arg4[%c0_16, %c0_17, %c0_18] : memref<1x8x128xf32, #tpu.memory_space<vmem>>, vector<1x8x128xf32>
    tpu.vector_store %arg4[%c0_16, %c0_17, %c0_18], %48 {strides = array<i32>} : memref<1x8x128xf32, #tpu.memory_space<vmem>>, vector<1x8x128xf32>,
    return
  }
  func.func @transform_0(%arg0: i32) -> (i32, i32) {
    %c0_i32 = arith.constant 0 : i32
    %c0_i32_0 = arith.constant 0 : i32
    return %arg0, %c0_i32 : i32, i32
  }
  func.func @transform_1(%arg0: i32) -> (i32, i32) {
    %c0_i32 = arith.constant 0 : i32
    %c0_i32_0 = arith.constant 0 : i32
    return %arg0, %c0_i32 : i32, i32
  }
  func.func @transform_2(%arg0: i32) -> (i32, i32) {
    %c0_i32 = arith.constant 0 : i32
    %c0_i32_0 = arith.constant 0 : i32
    return %arg0, %c0_i32 : i32, i32
  }
  func.func @transform_3(%arg0: i32) -> (i32, i32, i32) {
    %c0_i32 = arith.constant 0 : i32
    %c0_i32_0 = arith.constant 0 : i32
    %c0_i32_1 = arith.constant 0 : i32
    return %arg0, %c0_i32, %c0_i32_0 : i32, i32, i32
  }
}

</mosaic_0001>

<llo_original>
// kernel: tpu_custom_call.1
$region0: #{tpu_custom_call.1}
  #allocation0 [shape = 'u32[]', space=smem, size = 0x4, offset = 0x4, fixed_abs, tag = 'smem constant byte address 0x4 - core index']
  #allocation1 [shape = 'u32[72,128]{1,0:T(1,128)}', space=vmem, size = 0x9000, scoped, tag = 'internal scratch']
  %s0 = inlined_call_operand.hbm [shape: f32[8,32], index: 0, kind: input, shape index: {}]
  %s1 = inlined_call_operand.hbm [shape: f32[8,32], index: 1, kind: input, shape index: {}]
  %s2 = inlined_call_operand.hbm [shape: f32[8,32], index: 2, kind: input, shape index: {}]
  %s3 = inlined_call_operand.hbm [shape: f32[1,8,128], index: 3, kind: output, shape index: {}]
  %s4 = sld [smem:[#allocation0]]
  $region34: #{tpu_custom_call.1} parent=0
    _
  %s6 = ssub.s32 1, %s4
  %s7 = scalar_select 0, %s6, %s4
  $region1: #{tpu_custom_call.1} parent=0
    #allocation2 [shape = 'u8[4096]{0}', space=vmem, size = 0x1000, scoped, tag = 'input window, operand 0, single buffered']
    #allocation3 [shape = 's32[1]{0}', space=sflag, size = 0x4, scoped, tag = 'scoped memory for tpu_custom_call.1']
    #allocation4 [shape = 's32[1]{0}', space=sflag, size = 0x4, scoped, tag = 'scoped memory for tpu_custom_call.1']
    #allocation5 [shape = 'u8[4096]{0}', space=vmem, size = 0x1000, scoped, tag = 'input window, operand 1, single buffered']
    #allocation6 [shape = 's32[1]{0}', space=sflag, size = 0x4, scoped, tag = 'scoped memory for tpu_custom_call.1']
    #allocation7 [shape = 'u8[4096]{0}', space=vmem, size = 0x1000, scoped, tag = 'input window, operand 2, single buffered']
    #allocation8 [shape = 'u8[4096]{0}', space=vmem, size = 0x1000, scoped, tag = 'output window, operand 0, single buffered']
    %8 = vsyncpa [#allocation3], 0
    %9 = vsyncpa [#allocation6], 0
    %10 = vsyncpa [#allocation4], 0
    // Predicated region
    $region2: #{tpu_custom_call.1} parent=1 // pred_check
      _
    $region3: #{tpu_custom_call.1} parent=1 // pred_check_branch
      %12 = sbr.rel (0) target = $region5
    $region4: #{tpu_custom_call.1} parent=1 // pred_region
      %14 = vsyncadd [#allocation3], 0
      %s16 = sshll.u32 %s0, 4
      %s17 = int_to_ptr.hbm [resolvable:$true] %s16
      %s18 = sshll.u32 [#allocation2], 4
      %s19 = int_to_ptr.vmem [resolvable:$true] %s18
      %21 = dma.hbm_to_vmem [thread:$0]  %s17, 128, %s19, [#allocation3]
    $region5: #{tpu_custom_call.1} parent=1 // pred_fallthru
      _
    // Predicated region
    $region6: #{tpu_custom_call.1} parent=1 // pred_check
      _
    $region7: #{tpu_custom_call.1} parent=1 // pred_check_branch
      %23 = sbr.rel (0) target = $region9
    $region8: #{tpu_custom_call.1} parent=1 // pred_region
      %25 = vsyncadd [#allocation6], 0
      %s27 = sshll.u32 %s1, 4
      %s28 = int_to_ptr.hbm [resolvable:$true] %s27
      %s29 = sshll.u32 [#allocation5], 4
      %s30 = int_to_ptr.vmem [resolvable:$true] %s29
      %32 = dma.hbm_to_vmem [thread:$0]  %s28, 128, %s30, [#allocation6]
    $region9: #{tpu_custom_call.1} parent=1 // pred_fallthru
      _
    // Predicated region
    $region10: #{tpu_custom_call.1} parent=1 // pred_check
      _
    $region11: #{tpu_custom_call.1} parent=1 // pred_check_branch
      %34 = sbr.rel (0) target = $region13
    $region12: #{tpu_custom_call.1} parent=1 // pred_region
      %36 = vsyncadd [#allocation6], 0
      %s38 = sshll.u32 %s2, 4
      %s39 = int_to_ptr.hbm [resolvable:$true] %s38
      %s40 = sshll.u32 [#allocation7], 4
      %s41 = int_to_ptr.vmem [resolvable:$true] %s40
      %43 = dma.hbm_to_vmem [thread:$0]  %s39, 128, %s41, [#allocation6]
    $region13: #{tpu_custom_call.1} parent=1 // pred_fallthru
      _
    // Predicated region
    $region14: #{tpu_custom_call.1} parent=1 // pred_check
      _
    $region15: #{tpu_custom_call.1} parent=1 // pred_check_branch
      %45 = sbr.rel (0) target = $region17
    $region16: #{tpu_custom_call.1} parent=1 // pred_region
      %47 = dma.done [#allocation3], 128
    $region17: #{tpu_custom_call.1} parent=1 // pred_fallthru
      _
    // Predicated region
    $region18: #{tpu_custom_call.1} parent=1 // pred_check
      _
    $region19: #{tpu_custom_call.1} parent=1 // pred_check_branch
      %49 = sbr.rel (0) target = $region21
    $region20: #{tpu_custom_call.1} parent=1 // pred_region
      %51 = dma.done [#allocation6], 128
    $region21: #{tpu_custom_call.1} parent=1 // pred_fallthru
      _
    // Predicated region
    $region22: #{tpu_custom_call.1} parent=1 // pred_check
      _
    $region23: #{tpu_custom_call.1} parent=1 // pred_check_branch
      %53 = sbr.rel (0) target = $region25
    $region24: #{tpu_custom_call.1} parent=1 // pred_region
      %55 = dma.done [#allocation6], 128
    $region25: #{tpu_custom_call.1} parent=1 // pred_fallthru
      _
    %v56 = vld [vmem:[#allocation2] sm:$0xff]
    %v57 = vld [vmem:[#allocation5] sm:$0xff]
    %v58 = vld [vmem:[#allocation7] sm:$0xff]
    %v59 = vmul.f32 %v56, %v56
    %vm60 = vcmask 261120
    %v61 = vsel %vm60, %v59, 0.0
    %62 = vadd.xlane.f32.xlu0 %v61
    %v63 = vpop.xlane.xlu0 %62
    %v64 = vmul.f32 %v57, %v57
    %v65 = vsel %vm60, %v64, 0.0
    %66 = vadd.xlane.f32.xlu0 %v65
    %v67 = vpop.xlane.xlu0 %66
    %v68 = vmul.f32 %v58, %v58
    %v69 = vsel %vm60, %v68, 0.0
    %70 = vadd.xlane.f32.xlu0 %v69
    %v71 = vpop.xlane.xlu0 %70
    %v72 = vmul.f32 %v56, %v57
    %v73 = vsel %vm60, %v72, 0.0
    %74 = vadd.xlane.f32.xlu0 %v73
    %v75 = vpop.xlane.xlu0 %74
    %v76 = vmul.f32 %v56, %v58
    %v77 = vsel %vm60, %v76, 0.0
    %78 = vadd.xlane.f32.xlu0 %v77
    %v79 = vpop.xlane.xlu0 %78
    %v80 = vrsqrt.pop %v63
    %v81 = vmul.f32 %v80, %v63
    %v82 = vmul.f32 %v81, %v80
    %v83 = vmul.f32 0.5, %v82
    %v84 = vsub.f32 1.5, %v83
    %v85 = vmul.f32 %v80, %v84
    %vm86 = vweird.f32 %v63
    %vm87 = vweird.f32 %v80
    %vm88 = vmor %vm86, %vm87
    %v89 = vsel %vm88, %v80, %v85
    %v90 = vmin.f32 %v89, 1e+08
    %v91 = vrsqrt.pop %v67
    %v92 = vmul.f32 %v91, %v67
    %v93 = vmul.f32 %v92, %v91
    %v94 = vmul.f32 0.5, %v93
    %v95 = vsub.f32 1.5, %v94
    %v96 = vmul.f32 %v91, %v95
    %vm97 = vweird.f32 %v67
    %vm98 = vweird.f32 %v91
    %vm99 = vmor %vm97, %vm98
    %v100 = vsel %vm99, %v91, %v96
    %v101 = vmin.f32 %v100, 1e+08
    %v102 = vrsqrt.pop %v71
    %v103 = vmul.f32 %v102, %v71
    %v104 = vmul.f32 %v103, %v102
    %v105 = vmul.f32 0.5, %v104
    %v106 = vsub.f32 1.5, %v105
    %v107 = vmul.f32 %v102, %v106
    %vm108 = vweird.f32 %v71
    %vm109 = vweird.f32 %v102
    %vm110 = vmor %vm108, %vm109
    %v111 = vsel %vm110, %v102, %v107
    %v112 = vmin.f32 %v111, 1e+08
    %v113 = vmul.f32 %v90, %v101
    %v114 = vmul.f32 %v75, %v113
    %v115 = vmul.f32 %v90, %v112
    %v116 = vmul.f32 %v79, %v115
    %v117 = vsub.f32 1.0, %v114
    %v118 = vmul.f32 %v117, %v117
    %v119 = vmul.f32 %v116, %v116
    %v120 = vadd.f32 %v118, %v119
    %s121 = smul.u32 0, 8
    %v122 = vlaneseq
    %v123 = vshrl.u32 %v122, 7
    %v124 = vstv %s121
    %v125 = vadd.s32 %v124, %v123
    %vm126 = vcmp.lt.s32.totalorder %v125, 8
    %v127 = vsel %vm126, %v120, 0.0
    %vm128 = vcmask 7168
    %v129 = vsel %vm128, %v127, 0.0
    %130 = vadd.xlane.f32.xlu0 %v129
    %v131 = vpop.xlane.xlu0 %130
    %v132 = vrot.slane %v131, 4
    %v133 = vadd.f32 %v131, %v132
    %v134 = vrot.slane %v133, 2
    %v135 = vadd.f32 %v133, %v134
    %v136 = vrot.slane %v135, 1
    %v137 = vadd.f32 %v135, %v136
    %s138 = vtos %v137
    %v139 = vstv %s138
    %140 = vst [vmem:[#allocation8] sm:$0xff] %v139
    // Predicated region
    $region26: #{tpu_custom_call.1} parent=1 // pred_check
      _
    $region27: #{tpu_custom_call.1} parent=1 // pred_check_branch
      %142 = sbr.rel (0) target = $region29
    $region28: #{tpu_custom_call.1} parent=1 // pred_region
      %144 = vsyncadd [#allocation4], 0
      %s146 = sshll.u32 [#allocation8], 4
      %s147 = int_to_ptr.vmem [resolvable:$true] %s146
      %s148 = sshll.u32 %s3, 4
      %s149 = int_to_ptr.hbm [resolvable:$true] %s148
      %151 = dma.vmem_to_hbm [thread:$0]  %s147, 128, %s149, [#allocation4]
    $region29: #{tpu_custom_call.1} parent=1 // pred_fallthru
      _
    // Predicated region
    $region30: #{tpu_custom_call.1} parent=1 // pred_check
      _
    $region31: #{tpu_custom_call.1} parent=1 // pred_check_branch
      %153 = sbr.rel (0) target = $region33
    $region32: #{tpu_custom_call.1} parent=1 // pred_region
      %155 = dma.done [#allocation4], 128
    $region33: #{tpu_custom_call.1} parent=1 // pred_fallthru
      _
    %156 = vsyncpa [#allocation3], 1
    %157 = vsyncpa [#allocation6], 1
    %158 = vsyncpa [#allocation4], 1

</llo_original>
